<compile_context>
chip_gen: v6e
topology: v6e:2x2x1
jax: 0.10.0
libtpu: 0.0.40
codegen_flags: <defaults>
</compile_context>

<pallas_src>
import math

import jax
import jax.numpy as jnp
from jax.experimental import pallas as pl
from jax.experimental.pallas import tpu as pltpu


def _softplus_f32(x):
    # Numerically stable softplus, matches torch.nn.functional.softplus (beta=1).
    x = x.astype(jnp.float32)
    return jnp.maximum(x, 0.0) + jnp.log1p(jnp.exp(-jnp.abs(x)))


def _matmul_kernel(x_ref, w_ref, o_ref, acc_ref):
    # x_ref: (tm, tk) bf16   w_ref: (tk, tn) bf16   o_ref: (tm, tn) f32
    k = pl.program_id(2)

    @pl.when(k == 0)
    def _():
        acc_ref[...] = jnp.zeros_like(acc_ref)

    acc_ref[...] += jnp.dot(
        x_ref[...], w_ref[...], preferred_element_type=jnp.float32
    )

    @pl.when(k == pl.num_programs(2) - 1)
    def _():
        o_ref[...] = acc_ref[...].astype(o_ref.dtype)


def _matmul_bias_kernel(x_ref, w_ref, b_ref, o_ref, acc_ref):
    # Same as above, plus a (1, tn) f32 bias added once at the final K step.
    k = pl.program_id(2)

    @pl.when(k == 0)
    def _():
        acc_ref[...] = jnp.zeros_like(acc_ref)

    acc_ref[...] += jnp.dot(
        x_ref[...], w_ref[...], preferred_element_type=jnp.float32
    )

    @pl.when(k == pl.num_programs(2) - 1)
    def _():
        o_ref[...] = (acc_ref[...] + b_ref[...]).astype(o_ref.dtype)


def _round_up(x, m):
    return ((x + m - 1) // m) * m


def positive_linear(x, weight, bias=None, *, tm=None, tn=None, tk=None,
                    use_pallas=None, operand_dtype=jnp.bfloat16):
    """y = x @ softplus(weight).T + bias, weight in torch F.linear layout (out, in)."""
    x = jnp.asarray(x)
    weight = jnp.asarray(weight)
    out_features, in_features = weight.shape

    orig_shape = x.shape
    x2d = x.reshape(-1, in_features)
    M, K = x2d.shape
    N = out_features
    out_dtype = jnp.float32

    # softplus(W) computed once, in f32 (keeps v5e numerics), outside the kernel.
    # This is a single fused XLA pass (softplus + transpose + cast); padded
    # rows/cols below are exact zeros, so padded-K contributions are exactly 0.
    w_pos_t = _softplus_f32(weight).T  # (K, N), f32

    # Small-problem fallback: fixed per-call / per-step overhead dwarfs the math.
    if use_pallas is None:
        use_pallas = (M * K * N) >= (128 * 128 * 128)
    if not use_pallas:
        y = x2d.astype(jnp.float32) @ w_pos_t
        if bias is not None:
            y = y + jnp.asarray(bias, jnp.float32)
        return y.astype(out_dtype).reshape(*orig_shape[:-1], out_features)

    # Tile sizes: lane dims multiples of 128 (unmasked vst), sublane multiples
    # of 8, clamped to the padded problem dims.
    tm_user = tm is not None
    tn = tn if tn is not None else min(512, _round_up(N, 128))
    tk = tk if tk is not None else min(512, _round_up(K, 128))
    tm = tm if tm_user else min(512, _round_up(M, 8))

    N_pad = _round_up(N, tn)
    K_pad = _round_up(K, tk)
    # v7x has 2 TensorCores: make sure the parallel (i, j) grid has >= 2
    # programs when there is enough M to split.
    if (not tm_user and (N_pad // tn) == 1
            and (_round_up(M, tm) // tm) == 1 and M >= 16):
        tm = _round_up((M + 1) // 2, 8)
    M_pad = _round_up(M, tm)

    def pad2(a, rows, cols):
        pr, pc = rows - a.shape[0], cols - a.shape[1]
        if pr == 0 and pc == 0:
            return a
        return jnp.pad(a, ((0, pr), (0, pc)))

    # bf16 operands into the MXU; f32 accumulation inside the kernel.
    x_p = pad2(x2d, M_pad, K_pad).astype(operand_dtype)
    wt_p = pad2(w_pos_t, K_pad, N_pad).astype(operand_dtype)

    grid = (M_pad // tm, N_pad // tn, K_pad // tk)

    in_specs = [
        pl.BlockSpec((tm, tk), lambda i, j, k: (i, k)),
        pl.BlockSpec((tk, tn), lambda i, j, k: (k, j)),
    ]
    operands = [x_p, wt_p]
    kernel = _matmul_kernel
    if bias is not None:
        b_p = jnp.pad(jnp.asarray(bias, jnp.float32),
                      (0, N_pad - N)).reshape(1, N_pad)
        in_specs.append(pl.BlockSpec((1, tn), lambda i, j, k: (0, j)))
        operands.append(b_p)
        kernel = _matmul_bias_kernel

    bytes_accessed = (
        x_p.size * x_p.dtype.itemsize * (N_pad // tn)       # x re-read per j tile
        + wt_p.size * wt_p.dtype.itemsize * (M_pad // tm)   # W re-read per i tile
        + M_pad * N_pad * 4                                  # output writeback
    )
    cost = pl.CostEstimate(flops=2 * M_pad * N_pad * K_pad,
                           transcendentals=0,
                           bytes_accessed=int(bytes_accessed))

    out = pl.pallas_call(
        kernel,
        out_shape=jax.ShapeDtypeStruct((M_pad, N_pad), out_dtype),
        grid_spec=pltpu.PrefetchScalarGridSpec(
            num_scalar_prefetch=0,
            grid=grid,
            in_specs=in_specs,
            out_specs=pl.BlockSpec((tm, tn), lambda i, j, k: (i, j)),
            scratch_shapes=[pltpu.VMEM((tm, tn), jnp.float32)],
        ),
        compiler_params=pltpu.CompilerParams(
            dimension_semantics=("parallel", "parallel", "arbitrary"),
        ),
        cost_estimate=cost,
    )(*operands)

    out = out[:M, :N]
    return out.reshape(*orig_shape[:-1], out_features)


def _reference(x, weight, bias):
    w_pos = jnp.maximum(weight, 0.0) + jnp.log1p(jnp.exp(-jnp.abs(weight)))
    y = jnp.asarray(x, jnp.float32) @ w_pos.T.astype(jnp.float32)
    if bias is not None:
        y = y + jnp.asarray(bias, jnp.float32)
    return y


if __name__ == "__main__":
    key = jax.random.PRNGKey(0)
    kx, kw, kb = jax.random.split(key, 3)

    # --- small case, matches module usage (kernel path forced) ---
    B, IN, OUT = 8, 32, 64
    x = jax.random.normal(kx, (B, IN), jnp.float32)
    # Mimic module init: kaiming-uniform-ish weights shifted by weight_init_offset=-2.
    bound = 1.0 / math.sqrt(IN)
    weight = jax.random.uniform(kw, (OUT, IN), jnp.float32, -bound, bound) - 2.0
    bias = jax.random.uniform(kb, (OUT,), jnp.float32, -bound, bound)

    out = jax.block_until_ready(positive_linear(x, weight, bias, use_pallas=True))
    ref = _reference(x, weight, bias)
    assert out.shape == (B, OUT), out.shape
    err = float(jnp.max(jnp.abs(out - ref)))
    assert jnp.allclose(out, ref, atol=2e-2, rtol=2e-2), err

    # auto path (tiny problem -> XLA fallback), same semantics
    out_fb = jax.block_until_ready(positive_linear(x, weight, bias))
    assert jnp.allclose(out_fb, ref, atol=1e-5, rtol=1e-5)

    # --- larger multi-tile case, no bias, batched leading dims ---
    M2, K2, N2 = 384, 192, 320
    x2 = jax.random.normal(jax.random.PRNGKey(1), (3, M2 // 3, K2), jnp.float32)
    w2 = jax.random.normal(jax.random.PRNGKey(2), (N2, K2), jnp.float32) * 0.05 - 1.0
    out2 = jax.block_until_ready(positive_linear(x2, w2, None, use_pallas=True))
    ref2 = _reference(x2.reshape(-1, K2), w2, None).reshape(3, M2 // 3, N2)
    assert out2.shape == (3, M2 // 3, N2), out2.shape
    err2 = float(jnp.max(jnp.abs(out2 - ref2)))
    assert jnp.allclose(out2, ref2, atol=1e-1, rtol=5e-2), err2

    print("KERNEL_OK")
</pallas_src>

<mosaic_0001>
module attributes {stable_mosaic.version = 11 : i64} {
  func.func @_matmul_bias_kernel(%arg0: i32, %arg1: i32, %arg2: i32, %arg3: memref<8x128xbf16, #tpu.memory_space<vmem>>, %arg4: memref<128x128xbf16, #tpu.memory_space<vmem>>, %arg5: memref<1x128xf32, #tpu.memory_space<vmem>>, %arg6: memref<8x128xf32, #tpu.memory_space<vmem>>, %arg7: memref<8x128xf32, #tpu.memory_space<vmem>>) attributes {dimension_semantics = [#tpu.dimension_semantics<parallel>, #tpu.dimension_semantics<parallel>, #tpu.dimension_semantics<arbitrary>], iteration_bounds = array<i64: 1, 1, 1>, scalar_prefetch = 0 : i64, scratch_operands = 1 : i64, tpu.core_type = #tpu.core_type<tc>, window_params = [{transform_indices = @transform_0, window_bounds = array<i64: 8, 128>}, {transform_indices = @transform_1, window_bounds = array<i64: 128, 128>}, {transform_indices = @transform_2, window_bounds = array<i64: 1, 128>}, {transform_indices = @transform_3, window_bounds = array<i64: 8, 128>}]} {
    %c0_i32 = arith.constant 0 : i32
    %0 = arith.cmpi eq, %arg2, %c0_i32 : i32
    %1 = arith.extui %0 : i1 to i32
    %c0_i32_0 = arith.constant 0 : i32
    %2 = arith.cmpi ne, %1, %c0_i32_0 : i32
    scf.if %2 {
      %cst_10 = arith.constant 0.000000e+00 : f32
      %12 = vector.broadcast %cst_10 : f32 to vector<8x128xf32>
      %c0_11 = arith.constant 0 : index
      %c0_12 = arith.constant 0 : index
      %13 = vector.load %arg7[%c0_11, %c0_12] : memref<8x128xf32, #tpu.memory_space<vmem>>, vector<8x128xf32>
      tpu.vector_store %arg7[%c0_11, %c0_12], %12 {strides = array<i32>} : memref<8x128xf32, #tpu.memory_space<vmem>>, vector<8x128xf32>,
    } else {
    }
    %c0 = arith.constant 0 : index
    %c0_1 = arith.constant 0 : index
    %3 = vector.load %arg7[%c0, %c0_1] : memref<8x128xf32, #tpu.memory_space<vmem>>, vector<8x128xf32>
    %c0_2 = arith.constant 0 : index
    %c0_3 = arith.constant 0 : index
    %4 = vector.load %arg3[%c0_2, %c0_3] : memref<8x128xbf16, #tpu.memory_space<vmem>>, vector<8x128xbf16>
    %c0_4 = arith.constant 0 : index
    %c0_5 = arith.constant 0 : index
    %5 = vector.load %arg4[%c0_4, %c0_5] : memref<128x128xbf16, #tpu.memory_space<vmem>>, vector<128x128xbf16>
    %cst = arith.constant dense<0.000000e+00> : vector<8x128xf32>
    %6 = tpu.matmul %4, %5, %cst {dimension_numbers = #tpu.dot_dimension_numbers<[1], [0], [0], [1], [0, 0, 1, 1], [], []>} : vector<8x128xbf16>, vector<128x128xbf16>, vector<8x128xf32> -> vector<8x128xf32>
    %7 = arith.addf %3, %6 : vector<8x128xf32>
    %c0_6 = arith.constant 0 : index
    %c0_7 = arith.constant 0 : index
    %8 = vector.load %arg7[%c0_6, %c0_7] : memref<8x128xf32, #tpu.memory_space<vmem>>, vector<8x128xf32>
    tpu.vector_store %arg7[%c0_6, %c0_7], %7 {strides = array<i32>} : memref<8x128xf32, #tpu.memory_space<vmem>>, vector<8x128xf32>,
    %c0_i32_8 = arith.constant 0 : i32
    %9 = arith.cmpi eq, %arg2, %c0_i32_8 : i32
    %10 = arith.extui %9 : i1 to i32
    %c0_i32_9 = arith.constant 0 : i32
    %11 = arith.cmpi ne, %10, %c0_i32_9 : i32
    scf.if %11 {
      %c0_10 = arith.constant 0 : index
      %c0_11 = arith.constant 0 : index
      %12 = vector.load %arg7[%c0_10, %c0_11] : memref<8x128xf32, #tpu.memory_space<vmem>>, vector<8x128xf32>
      %c0_12 = arith.constant 0 : index
      %c0_13 = arith.constant 0 : index
      %13 = vector.load %arg5[%c0_12, %c0_13] : memref<1x128xf32, #tpu.memory_space<vmem>>, vector<1x128xf32>
      %14 = vector.broadcast %13 : vector<1x128xf32> to vector<8x128xf32>
      %15 = arith.addf %12, %14 : vector<8x128xf32>
      %c0_14 = arith.constant 0 : index
      %c0_15 = arith.constant 0 : index
      %16 = vector.load %arg6[%c0_14, %c0_15] : memref<8x128xf32, #tpu.memory_space<vmem>>, vector<8x128xf32>
      tpu.vector_store %arg6[%c0_14, %c0_15], %15 {strides = array<i32>} : memref<8x128xf32, #tpu.memory_space<vmem>>, vector<8x128xf32>,
    } else {
    }
    return
  }
  func.func @transform_0(%arg0: i32, %arg1: i32, %arg2: i32) -> (i32, i32) {
    %c0_i32 = arith.constant 0 : i32
    return %arg0, %arg2 : i32, i32
  }
  func.func @transform_1(%arg0: i32, %arg1: i32, %arg2: i32) -> (i32, i32) {
    %c0_i32 = arith.constant 0 : i32
    return %arg2, %arg1 : i32, i32
  }
  func.func @transform_2(%arg0: i32, %arg1: i32, %arg2: i32) -> (i32, i32) {
    %c0_i32 = arith.constant 0 : i32
    %c0_i32_0 = arith.constant 0 : i32
    return %c0_i32, %arg1 : i32, i32
  }
  func.func @transform_3(%arg0: i32, %arg1: i32, %arg2: i32) -> (i32, i32) {
    %c0_i32 = arith.constant 0 : i32
    return %arg0, %arg1 : i32, i32
  }
}

</mosaic_0001>

<llo_original>
// kernel: tpu_custom_call.1
$region0: #{tpu_custom_call.1}
  #allocation0 [shape = 'u32[]', space=smem, size = 0x4, offset = 0x4, fixed_abs, tag = 'smem constant byte address 0x4 - core index']
  #allocation1 [shape = 'u32[144,128]{1,0:T(1,128)}', space=vmem, size = 0x12000, scoped, tag = 'internal scratch']
  #allocation2 [shape = 'f32[8,128]{1,0:T(8,128)}', space=vmem, size = 0x1000, scoped, tag = 'scratch operand']
  %s0 = inlined_call_operand.hbm [shape: bf16[8,128], index: 0, kind: input, shape index: {}]
  %s1 = inlined_call_operand.hbm [shape: bf16[128,128], index: 1, kind: input, shape index: {}]
  %s2 = inlined_call_operand.vmem [shape: f32[1,128], index: 2, kind: input, shape index: {}]
  %s3 = inlined_call_operand.hbm [shape: f32[8,128], index: 3, kind: output, shape index: {}]
  %s4 = sld [smem:[#allocation0]]
  $region38: #{tpu_custom_call.1} parent=0
    _
  %s6 = ssub.s32 1, %s4
  %s7 = scalar_select 0, %s6, %s4
  $region1: #{tpu_custom_call.1} parent=0
    #allocation3 [shape = 'u8[2048]{0}', space=vmem, size = 0x800, scoped, tag = 'input window, operand 0, single buffered']
    #allocation4 [shape = 's32[1]{0}', space=sflag, size = 0x4, scoped, tag = 'scoped memory for tpu_custom_call.1']
    #allocation5 [shape = 's32[1]{0}', space=sflag, size = 0x4, scoped, tag = 'scoped memory for tpu_custom_call.1']
    #allocation6 [shape = 'u8[32768]{0}', space=vmem, size = 0x8000, scoped, tag = 'input window, operand 1, single buffered']
    #allocation7 [shape = 's32[1]{0}', space=sflag, size = 0x4, scoped, tag = 'scoped memory for tpu_custom_call.1']
    #allocation8 [shape = 'u8[4096]{0}', space=vmem, size = 0x1000, scoped, tag = 'output window, operand 0, single buffered']
    %8 = vsyncpa [#allocation4], 0
    %9 = vsyncpa [#allocation7], 0
    %10 = vsyncpa [#allocation5], 0
    // Predicated region
    $region2: #{tpu_custom_call.1} parent=1 // pred_check
      _
    $region3: #{tpu_custom_call.1} parent=1 // pred_check_branch
      %12 = sbr.rel (0) target = $region5
    $region4: #{tpu_custom_call.1} parent=1 // pred_region
      %s14 = ssub.s32 64, 64
      %15 = vsyncadd [#allocation4], %s14
      %s17 = sshll.u32 [#allocation3], 4
      %s18 = int_to_ptr.vmem [resolvable:$true] %s17
      %20 = dma.hbm_to_vmem [thread:$0]  %s0, 64, %s18, [#allocation4]
    $region5: #{tpu_custom_call.1} parent=1 // pred_fallthru
      _
    // Predicated region
    $region6: #{tpu_custom_call.1} parent=1 // pred_check
      _
    $region7: #{tpu_custom_call.1} parent=1 // pred_check_branch
      %22 = sbr.rel (0) target = $region9
    $region8: #{tpu_custom_call.1} parent=1 // pred_region
      %s24 = ssub.s32 1024, 1024
      %25 = vsyncadd [#allocation7], %s24
      %s26 = sshll.u32 [#allocation6], 4
      %s27 = int_to_ptr.vmem [resolvable:$true] %s26
      %32 = dma.hbm_to_vmem [thread:$0]  %s1, 1024, %s27, [#allocation7], 64, 64, 4
    $region9: #{tpu_custom_call.1} parent=1 // pred_fallthru
      _
    // Predicated region
    $region10: #{tpu_custom_call.1} parent=1 // pred_check
      _
    $region11: #{tpu_custom_call.1} parent=1 // pred_check_branch
      %34 = sbr.rel (0) target = $region13
    $region12: #{tpu_custom_call.1} parent=1 // pred_region
      _
    $region13: #{tpu_custom_call.1} parent=1 // pred_fallthru
      _
    // Predicated region
    $region14: #{tpu_custom_call.1} parent=1 // pred_check
      _
    $region15: #{tpu_custom_call.1} parent=1 // pred_check_branch
      %36 = sbr.rel (0) target = $region17
    $region16: #{tpu_custom_call.1} parent=1 // pred_region
      %37 = dma.done [#allocation4], 64
    $region17: #{tpu_custom_call.1} parent=1 // pred_fallthru
      _
    // Predicated region
    $region18: #{tpu_custom_call.1} parent=1 // pred_check
      _
    $region19: #{tpu_custom_call.1} parent=1 // pred_check_branch
      %39 = sbr.rel (0) target = $region21
    $region20: #{tpu_custom_call.1} parent=1 // pred_region
      %40 = dma.done [#allocation7], 1024
    $region21: #{tpu_custom_call.1} parent=1 // pred_fallthru
      _
    %p42 = scmp.eq.s32.totalorder 0, 0
    // Predicated region
    $region22: #{tpu_custom_call.1} parent=1 // pred_check
      %p43 = pneg %p42
    $region23: #{tpu_custom_call.1} parent=1 // pred_check_branch
      %45 = sbr.rel (%p43) target = $region25
    $region24: #{tpu_custom_call.1} parent=1 // pred_region
      %46 = vst [vmem:[#allocation2] sm:$0xff] 0.0
    $region25: #{tpu_custom_call.1} parent=1 // pred_fallthru
      _
    %v47 = vld [vmem:[#allocation2] sm:$0xff]
    %v48 = vld [vmem:[#allocation3] sm:$0xf]
    %v49 = vld [vmem:[#allocation6] sm:$0xf]
    %v50 = vld [vmem:[#allocation6 + $0x4] sm:$0xf]
    %v51 = vld [vmem:[#allocation6 + $0x8] sm:$0xf]
    %v52 = vld [vmem:[#allocation6 + $0xc] sm:$0xf]
    %v53 = vld [vmem:[#allocation6 + $0x10] sm:$0xf]
    %v54 = vld [vmem:[#allocation6 + $0x14] sm:$0xf]
    %v55 = vld [vmem:[#allocation6 + $0x18] sm:$0xf]
    %v56 = vld [vmem:[#allocation6 + $0x1c] sm:$0xf]
    %v57 = vld [vmem:[#allocation6 + $0x20] sm:$0xf]
    %v58 = vld [vmem:[#allocation6 + $0x24] sm:$0xf]
    %v59 = vld [vmem:[#allocation6 + $0x28] sm:$0xf]
    %v60 = vld [vmem:[#allocation6 + $0x2c] sm:$0xf]
    %v61 = vld [vmem:[#allocation6 + $0x30] sm:$0xf]
    %v62 = vld [vmem:[#allocation6 + $0x34] sm:$0xf]
    %v63 = vld [vmem:[#allocation6 + $0x38] sm:$0xf]
    %v64 = vld [vmem:[#allocation6 + $0x3c] sm:$0xf]
    %v81 = vunpack.c.l.b16 %v49
    %v82 = vunpack.c.l.b16 %v50
    %v83 = vunpack.c.l.b16 %v51
    %v84 = vunpack.c.l.b16 %v52
    %v85 = vunpack.c.l.b16 %v53
    %v86 = vunpack.c.l.b16 %v54
    %v87 = vunpack.c.l.b16 %v55
    %v88 = vunpack.c.l.b16 %v56
    %v89 = vunpack.c.l.b16 %v57
    %v90 = vunpack.c.l.b16 %v58
    %v91 = vunpack.c.l.b16 %v59
    %v92 = vunpack.c.l.b16 %v60
    %v93 = vunpack.c.l.b16 %v61
    %v94 = vunpack.c.l.b16 %v62
    %v95 = vunpack.c.l.b16 %v63
    %v96 = vunpack.c.l.b16 %v64
    %v97 = vpack.c.b16 %v82, %v81
    %v98 = vpack.c.b16 %v84, %v83
    %v99 = vpack.c.b16 %v86, %v85
    %v100 = vpack.c.b16 %v88, %v87
    %v101 = vpack.c.b16 %v90, %v89
    %v102 = vpack.c.b16 %v92, %v91
    %v103 = vpack.c.b16 %v94, %v93
    %v104 = vpack.c.b16 %v96, %v95
    %113 = vmatprep.subr.bf16.mxu0 0
    %114 = vmatpush1.bf16.msra.mxu0 %v104
    %115 = vmatprep.subr.bf16.mxu0 0
    %116 = vmatpush1.bf16.msra.mxu0 %v103
    %117 = vmatprep.subr.bf16.mxu0 0
    %118 = vmatpush1.bf16.msra.mxu0 %v102
    %119 = vmatprep.subr.bf16.mxu0 0
    %120 = vmatpush1.bf16.msra.mxu0 %v101
    %121 = vmatprep.subr.bf16.mxu0 0
    %122 = vmatpush1.bf16.msra.mxu0 %v100
    %123 = vmatprep.subr.bf16.mxu0 0
    %124 = vmatpush1.bf16.msra.mxu0 %v99
    %125 = vmatprep.subr.bf16.mxu0 0
    %126 = vmatpush1.bf16.msra.mxu0 %v98
    %127 = vmatprep.subr.bf16.mxu0 0
    %128 = vmatpush1.bf16.msra.mxu0 %v97
    %129 = vmatprep.subr.bf16.mxu0 0
    %130 = vmatpush2.bf16.msra.mxu0 0
    %131 = vmatprep.subr.bf16.mxu0 0
    %132 = vmatpush2.bf16.msra.mxu0 0
    %133 = vmatprep.subr.bf16.mxu0 0
    %134 = vmatpush2.bf16.msra.mxu0 0
    %135 = vmatprep.subr.bf16.mxu0 0
    %136 = vmatpush2.bf16.msra.mxu0 0
    %137 = vmatprep.subr.bf16.mxu0 0
    %138 = vmatpush2.bf16.msra.mxu0 0
    %139 = vmatprep.subr.bf16.mxu0 0
    %140 = vmatpush2.bf16.msra.mxu0 0
    %141 = vmatprep.subr.bf16.mxu0 0
    %142 = vmatpush2.bf16.msra.mxu0 0
    %143 = vmatprep.subr.bf16.mxu0 0
    %144 = vmatpush2.bf16.msra.mxu0 0
    %145 = vmatprep.mubr.bf16.mxu0 0
    %146 = vmatmul.mubr.bf16.gmra.mxu0 %v48
    %v147 = vpop.f32.mrf.mxu0
    %v148 = vadd.f32 0.0, %v147
    %v149 = vpop.f32.mrf.mxu0
    %v150 = vpop.f32.mrf.mxu0
    %v151 = vpop.f32.mrf.mxu0
    %152 = vdwg.mxu0
    %v153 = vadd.f32 %v47, %v148
    %154 = vst [vmem:[#allocation2] sm:$0xff] %v153
    // Predicated region
    $region26: #{tpu_custom_call.1} parent=1 // pred_check
      %p155 = pneg %p42
    $region27: #{tpu_custom_call.1} parent=1 // pred_check_branch
      %157 = sbr.rel (%p155) target = $region29
    $region28: #{tpu_custom_call.1} parent=1 // pred_region
      %v158 = vld [vmem:[#allocation2] sm:$0xff]
      %v159 = vld [vmem:[%s2] sm:$0x1]
      %v161 = vlaneseq
      %v162 = vshrl.u32 %v161, 7
      %v163 = vsub.s32 0, %v162
      %v164 = vrot.slane %v159, %v163
      %v166 = vadd.f32 %v158, %v164
      %167 = vst [vmem:[#allocation8] sm:$0xff] %v166
    $region29: #{tpu_custom_call.1} parent=1 // pred_fallthru
      _
    // Predicated region
    $region30: #{tpu_custom_call.1} parent=1 // pred_check
      _
    $region31: #{tpu_custom_call.1} parent=1 // pred_check_branch
      %169 = sbr.rel (0) target = $region33
    $region32: #{tpu_custom_call.1} parent=1 // pred_region
      %s171 = ssub.s32 128, 128
      %172 = vsyncadd [#allocation5], %s171
      %s174 = sshll.u32 [#allocation8], 4
      %s175 = int_to_ptr.vmem [resolvable:$true] %s174
      %177 = dma.vmem_to_hbm [thread:$0]  %s175, 128, %s3, [#allocation5]
    $region33: #{tpu_custom_call.1} parent=1 // pred_fallthru
      _
    // Predicated region
    $region34: #{tpu_custom_call.1} parent=1 // pred_check
      _
    $region35: #{tpu_custom_call.1} parent=1 // pred_check_branch
      %179 = sbr.rel (0) target = $region37
    $region36: #{tpu_custom_call.1} parent=1 // pred_region
      %180 = dma.done [#allocation5], 128
    $region37: #{tpu_custom_call.1} parent=1 // pred_fallthru
      _
    %181 = vsyncpa [#allocation4], 1
    %182 = vsyncpa [#allocation7], 1
    %183 = vsyncpa [#allocation5], 1

</llo_original>
